<compile_context>
chip_gen: v6e
topology: v6e:2x2x1
jax: 0.10.0
libtpu: 0.0.40
codegen_flags: <defaults>
</compile_context>

<pallas_src>
import numpy as np
import jax
import jax.numpy as jnp
from jax.experimental import pallas as pl
from jax.experimental.pallas import tpu as pltpu


def positional_encoding_1d(length, channels, dtype=jnp.float32):
    """Standard 1-D sinusoidal positional encoding, shape (length, channels).

    PositionalEncoding1D is not defined in the provided snippet; this follows
    the common `positional_encodings` package convention (first half sin,
    second half cos, truncated to `channels`).  It depends only on positions
    and channels, so it is precomputed host-side and added inside the kernel.
    """
    c = int(np.ceil(channels / 2) * 2)
    inv_freq = 1.0 / (10000.0 ** (np.arange(0, c, 2, dtype=np.float64) / c))
    pos = np.arange(length, dtype=np.float64)
    ang = np.einsum("i,j->ij", pos, inv_freq)                  # (length, c//2)
    emb = np.concatenate([np.sin(ang), np.cos(ang)], axis=-1)  # (length, c)
    return jnp.asarray(emb[:, :channels], dtype=dtype)


def _fifo_n2n_kernel(inp_ref, q_ref, mem_ref, wa_ref, wc_ref, adda_ref, addc_ref,
                     out_ref, newmem_ref):
    # inp_ref    : (TB, E)     new item to push into the FIFO
    # q_ref      : (TB, Q)     query
    # mem_ref    : (TB, M, E)  current memory
    # wa_ref     : (E, Q)      A.weight^T        (resident across the grid)
    # wc_ref     : (E, Q)      C.weight^T        (resident)
    # adda_ref   : (M, Q)      A.bias + pos_enc  (resident)
    # addc_ref   : (M, Q)      C.bias + pos_enc  (resident)
    # out_ref    : (TB, Q)     read output
    # newmem_ref : (TB, M, E)  updated FIFO memory
    tb, m_slots, e = mem_ref.shape
    q_size = wa_ref.shape[1]

    mem = mem_ref[...]                                       # (TB, M, E)
    memf = mem.astype(jnp.float32).reshape(tb * m_slots, e)

    # ---- read path ---------------------------------------------------------
    # A(memory) + positional encoding (+bias folded in).  Real matmul -> MXU.
    am = jnp.dot(memf, wa_ref[...].astype(jnp.float32),
                 preferred_element_type=jnp.float32).reshape(tb, m_slots, q_size)
    am = am + adda_ref[...].astype(jnp.float32)

    # attention scores: per-row q . Am (kept off the MXU: multiply + lane reduce)
    q = q_ref[...].astype(jnp.float32)                       # (TB, Q)
    scores = jnp.sum(q[:, None, :] * am, axis=-1)            # (TB, M)

    # softmax over memory slots; denominator reciprocal on the EUP.
    smax = jnp.max(scores, axis=-1, keepdims=True)
    e_w = jnp.exp(scores - smax)
    w = e_w * pl.reciprocal(jnp.sum(e_w, axis=-1, keepdims=True), approx=True)

    # C(memory) + positional encoding, then weighted sum over slots.
    cm = jnp.dot(memf, wc_ref[...].astype(jnp.float32),
                 preferred_element_type=jnp.float32).reshape(tb, m_slots, q_size)
    cm = cm + addc_ref[...].astype(jnp.float32)
    out = jnp.sum(w[:, :, None] * cm, axis=1)                # (TB, Q)
    out_ref[...] = out.astype(out_ref.dtype)

    # ---- write path --------------------------------------------------------
    # new_memory = cat([input, memory], 1)[:, :M]; built in registers and
    # written with a single dense full-tile store (no masked partial stores).
    shifted = jnp.concatenate(
        [inp_ref[...].astype(mem.dtype)[:, None, :], mem[:, : m_slots - 1, :]],
        axis=1)
    newmem_ref[...] = shifted
    # TODO(synk): a ring buffer with a scalar-prefetched head index would avoid
    # rewriting the whole (B, M, E) memory every call (halves HBM traffic), but
    # it changes the module's state contract, so the exact FIFO shift is kept.


def _choose_block_batch(batch, m_slots, e, q, dtype_bytes=4,
                        vmem_budget_bytes=8 * 1024 * 1024):
    """How many batch rows each grid step processes.

    Per-step blocks are double-buffered, so the live footprint is roughly
    2 * TB * (2*M*E + E + 2*Q) * bytes plus small resident weights.  TB must be
    a multiple of 8 (so the 2-D (TB,E)/(TB,Q) blocks are sublane-dense) unless
    it covers the whole (small) batch, and we keep >= 2 grid steps when the
    batch allows so the 'parallel' axis can shard across v7x's 2 TensorCores.
    """
    if batch < 8:
        return batch
    per_row = 2 * (2 * m_slots * e + e + 2 * q) * dtype_bytes
    tb = max(8, (vmem_budget_bytes // max(per_row, 1)) // 8 * 8)
    tb = min(tb, ((batch + 7) // 8) * 8)
    if batch >= 16:
        tb = min(tb, max(8, (batch // 2) // 8 * 8))
    return int(tb)


def fifo_memory_n2n_forward(inp, query, memory, w_a, b_a, w_c, b_c, pos_enc,
                            *, block_batch=None):
    """inp: (B,1,E), query: (B,1,Q), memory: (B,M,E), w_a/w_c: (E,Q), b_a/b_c: (Q,).

    Returns (out (B,Q), new_memory (B,M,E)) matching FIFOMemoryN2N.forward.
    """
    B, M, E = memory.shape
    Q = w_a.shape[1]
    dtype = memory.dtype
    dtype_bytes = jnp.dtype(dtype).itemsize

    inp2 = inp.reshape(B, E)
    query2 = query.reshape(B, Q)
    # Fold the Linear biases and the (position-only) encoding into one additive
    # (M, Q) term per projection -- hoisted out of the kernel.
    add_a = (pos_enc + b_a[None, :]).astype(jnp.float32)
    add_c = (pos_enc + b_c[None, :]).astype(jnp.float32)

    tb = _choose_block_batch(B, M, E, Q, dtype_bytes) if block_batch is None else block_batch
    Bp = int(pl.cdiv(B, tb)) * tb
    if Bp != B:
        pad = Bp - B
        inp2 = jnp.pad(inp2, ((0, pad), (0, 0)))
        query2 = jnp.pad(query2, ((0, pad), (0, 0)))
        memory_p = jnp.pad(memory, ((0, pad), (0, 0), (0, 0)))
    else:
        memory_p = memory

    # Explicit scoped-VMEM limit sized to the block choice (<= v7x default).
    block_bytes = 2 * tb * (2 * M * E + E + 2 * Q) * dtype_bytes
    weight_bytes = 2 * (2 * E * Q + 2 * M * Q) * 4
    vmem_limit = int(min(32 * 1024 * 1024,
                         max(16 * 1024 * 1024, 4 * (block_bytes + weight_bytes))))

    out, new_mem = pl.pallas_call(
        _fifo_n2n_kernel,
        out_shape=(
            jax.ShapeDtypeStruct((Bp, Q), dtype),
            jax.ShapeDtypeStruct((Bp, M, E), dtype),
        ),
        grid_spec=pltpu.PrefetchScalarGridSpec(
            num_scalar_prefetch=0,
            grid=(Bp // tb,),
            in_specs=[
                pl.BlockSpec((tb, E), lambda b: (b, 0)),         # input (new item)
                pl.BlockSpec((tb, Q), lambda b: (b, 0)),         # query
                pl.BlockSpec((tb, M, E), lambda b: (b, 0, 0)),   # memory
                pl.BlockSpec((E, Q), lambda b: (0, 0)),          # A weight (resident)
                pl.BlockSpec((E, Q), lambda b: (0, 0)),          # C weight (resident)
                pl.BlockSpec((M, Q), lambda b: (0, 0)),          # A bias + pos-enc
                pl.BlockSpec((M, Q), lambda b: (0, 0)),          # C bias + pos-enc
            ],
            out_specs=[
                pl.BlockSpec((tb, Q), lambda b: (b, 0)),         # read output
                pl.BlockSpec((tb, M, E), lambda b: (b, 0, 0)),   # new memory
            ],
        ),
        compiler_params=pltpu.CompilerParams(
            dimension_semantics=("parallel",),
            vmem_limit_bytes=vmem_limit,
        ),
        input_output_aliases={2: 1},   # memory buffer -> new_memory output
    )(inp2, query2, memory_p, w_a, w_c, add_a, add_c)

    return out[:B], new_mem[:B]


def _reference(inp, query, memory, w_a, b_a, w_c, b_c, pos_enc):
    """Pure-JAX reference mirroring FIFOMemoryN2N.forward."""
    am = jnp.einsum("bme,eq->bmq", memory, w_a) + b_a + pos_enc
    scores = jnp.einsum("boq,bmq->bom", query, am)           # bmm(query, Am^T): (B,1,M)
    w = jax.nn.softmax(scores, axis=2)
    cm = jnp.einsum("bme,eq->bmq", memory, w_c) + b_c + pos_enc
    out = jnp.sum(jnp.swapaxes(w, 1, 2) * cm, axis=1)        # (B, Q)
    new_mem = jnp.concatenate([inp, memory], axis=1)[:, : memory.shape[1]]
    return out, new_mem


if __name__ == "__main__":
    # batch, memory_size, mem_embed_size, query_size
    B, M, E, Q = 16, 8, 128, 128
    key = jax.random.PRNGKey(0)
    k = jax.random.split(key, 7)
    inp = jax.random.normal(k[0], (B, 1, E), dtype=jnp.float32)
    query = jax.random.normal(k[1], (B, 1, Q), dtype=jnp.float32)
    memory = jax.random.normal(k[2], (B, M, E), dtype=jnp.float32)

    # nn.Linear-style parameters (stored as (in, out) so the kernel does mem @ W)
    lim = 1.0 / np.sqrt(E)
    w_a = jax.random.uniform(k[3], (E, Q), jnp.float32, -lim, lim)
    b_a = jax.random.uniform(k[4], (Q,), jnp.float32, -lim, lim)
    w_c = jax.random.uniform(k[5], (E, Q), jnp.float32, -lim, lim)
    b_c = jax.random.uniform(k[6], (Q,), jnp.float32, -lim, lim)
    pos_enc = positional_encoding_1d(M, Q)

    ref_out, ref_mem = _reference(inp, query, memory, w_a, b_a, w_c, b_c, pos_enc)

    out, new_mem = fifo_memory_n2n_forward(inp, query, memory,
                                           w_a, b_a, w_c, b_c, pos_enc)
    jax.block_until_ready((out, new_mem))

    assert out.shape == (B, Q) and new_mem.shape == (B, M, E)
    assert jnp.allclose(out, ref_out, atol=5e-3, rtol=5e-3), "read output mismatch"
    assert jnp.allclose(new_mem, ref_mem), "new_memory mismatch"

    print("KERNEL_OK")
</pallas_src>

<mosaic_0001>
module attributes {stable_mosaic.version = 11 : i64} {
  func.func @_fifo_n2n_kernel(%arg0: i32, %arg1: memref<8x128xf32, #tpu.memory_space<vmem>>, %arg2: memref<8x128xf32, #tpu.memory_space<vmem>>, %arg3: memref<8x8x128xf32, #tpu.memory_space<vmem>>, %arg4: memref<128x128xf32, #tpu.memory_space<vmem>>, %arg5: memref<128x128xf32, #tpu.memory_space<vmem>>, %arg6: memref<8x128xf32, #tpu.memory_space<vmem>>, %arg7: memref<8x128xf32, #tpu.memory_space<vmem>>, %arg8: memref<8x128xf32, #tpu.memory_space<vmem>>, %arg9: memref<8x8x128xf32, #tpu.memory_space<vmem>>) attributes {dimension_semantics = [#tpu.dimension_semantics<parallel>], iteration_bounds = array<i64: 2>, scalar_prefetch = 0 : i64, scratch_operands = 0 : i64, tpu.core_type = #tpu.core_type<tc>, window_params = [{transform_indices = @transform_0, window_bounds = array<i64: 8, 128>}, {transform_indices = @transform_1, window_bounds = array<i64: 8, 128>}, {transform_indices = @transform_2, window_bounds = array<i64: 8, 8, 128>}, {pipeline_mode = #tpu.pipeline_mode<synchronous>, transform_indices = @transform_3, window_bounds = array<i64: 128, 128>}, {pipeline_mode = #tpu.pipeline_mode<synchronous>, transform_indices = @transform_4, window_bounds = array<i64: 128, 128>}, {pipeline_mode = #tpu.pipeline_mode<synchronous>, transform_indices = @transform_5, window_bounds = array<i64: 8, 128>}, {pipeline_mode = #tpu.pipeline_mode<synchronous>, transform_indices = @transform_6, window_bounds = array<i64: 8, 128>}, {transform_indices = @transform_7, window_bounds = array<i64: 8, 128>}, {transform_indices = @transform_8, window_bounds = array<i64: 8, 8, 128>}]} {
    %c0 = arith.constant 0 : index
    %c0_0 = arith.constant 0 : index
    %c0_1 = arith.constant 0 : index
    %0 = vector.load %arg3[%c0, %c0_0, %c0_1] : memref<8x8x128xf32, #tpu.memory_space<vmem>>, vector<8x8x128xf32>
    %1 = vector.shape_cast %0 : vector<8x8x128xf32> to vector<64x128xf32>
    %c0_2 = arith.constant 0 : index
    %c0_3 = arith.constant 0 : index
    %2 = vector.load %arg4[%c0_2, %c0_3] : memref<128x128xf32, #tpu.memory_space<vmem>>, vector<128x128xf32>
    %cst = arith.constant dense<0.000000e+00> : vector<64x128xf32>
    %3 = tpu.matmul %1, %2, %cst {dimension_numbers = #tpu.dot_dimension_numbers<[1], [0], [0], [1], [0, 0, 1, 1], [], []>} : vector<64x128xf32>, vector<128x128xf32>, vector<64x128xf32> -> vector<64x128xf32>
    %4 = vector.shape_cast %3 : vector<64x128xf32> to vector<8x8x128xf32>
    %c0_4 = arith.constant 0 : index
    %c0_5 = arith.constant 0 : index
    %5 = vector.load %arg6[%c0_4, %c0_5] : memref<8x128xf32, #tpu.memory_space<vmem>>, vector<8x128xf32>
    %6 = vector.shape_cast %5 : vector<8x128xf32> to vector<1x8x128xf32>
    %7 = vector.broadcast %6 : vector<1x8x128xf32> to vector<8x8x128xf32>
    %8 = arith.addf %4, %7 : vector<8x8x128xf32>
    %c0_6 = arith.constant 0 : index
    %c0_7 = arith.constant 0 : index
    %9 = vector.load %arg2[%c0_6, %c0_7] : memref<8x128xf32, #tpu.memory_space<vmem>>, vector<8x128xf32>
    %10 = vector.shape_cast %9 : vector<8x128xf32> to vector<8x1x128xf32>
    %11 = vector.broadcast %10 : vector<8x1x128xf32> to vector<8x8x128xf32>
    %12 = arith.mulf %11, %8 : vector<8x8x128xf32>
    %cst_8 = arith.constant dense<0.000000e+00> : vector<8x8xf32>
    %13 = vector.multi_reduction <add>, %12, %cst_8 [2] : vector<8x8x128xf32> to vector<8x8xf32>
    %cst_9 = arith.constant dense<0xFF800000> : vector<8xf32>
    %14 = vector.multi_reduction <maximumf>, %13, %cst_9 [1] : vector<8x8xf32> to vector<8xf32>
    %15 = vector.shape_cast %14 : vector<8xf32> to vector<8x1xf32>
    %16 = vector.broadcast %15 : vector<8x1xf32> to vector<8x8xf32>
    %17 = arith.subf %13, %16 : vector<8x8xf32>
    %18 = math.exp %17 : vector<8x8xf32>
    %cst_10 = arith.constant dense<0.000000e+00> : vector<8xf32>
    %19 = vector.multi_reduction <add>, %18, %cst_10 [1] : vector<8x8xf32> to vector<8xf32>
    %20 = vector.shape_cast %19 : vector<8xf32> to vector<8x1xf32>
    %21 = tpu.reciprocal %20 {approx = true} : vector<8x1xf32> -> vector<8x1xf32>
    %22 = vector.broadcast %21 : vector<8x1xf32> to vector<8x8xf32>
    %23 = arith.mulf %18, %22 : vector<8x8xf32>
    %c0_11 = arith.constant 0 : index
    %c0_12 = arith.constant 0 : index
    %24 = vector.load %arg5[%c0_11, %c0_12] : memref<128x128xf32, #tpu.memory_space<vmem>>, vector<128x128xf32>
    %cst_13 = arith.constant dense<0.000000e+00> : vector<64x128xf32>
    %25 = tpu.matmul %1, %24, %cst_13 {dimension_numbers = #tpu.dot_dimension_numbers<[1], [0], [0], [1], [0, 0, 1, 1], [], []>} : vector<64x128xf32>, vector<128x128xf32>, vector<64x128xf32> -> vector<64x128xf32>
    %26 = vector.shape_cast %25 : vector<64x128xf32> to vector<8x8x128xf32>
    %c0_14 = arith.constant 0 : index
    %c0_15 = arith.constant 0 : index
    %27 = vector.load %arg7[%c0_14, %c0_15] : memref<8x128xf32, #tpu.memory_space<vmem>>, vector<8x128xf32>
    %28 = vector.shape_cast %27 : vector<8x128xf32> to vector<1x8x128xf32>
    %29 = vector.broadcast %28 : vector<1x8x128xf32> to vector<8x8x128xf32>
    %30 = arith.addf %26, %29 : vector<8x8x128xf32>
    %31 = vector.shape_cast %23 : vector<8x8xf32> to vector<8x8x1xf32>
    %32 = vector.broadcast %31 : vector<8x8x1xf32> to vector<8x8x128xf32>
    %33 = arith.mulf %32, %30 : vector<8x8x128xf32>
    %cst_16 = arith.constant dense<0.000000e+00> : vector<8x128xf32>
    %34 = vector.multi_reduction <add>, %33, %cst_16 [1] : vector<8x8x128xf32> to vector<8x128xf32>
    %c0_17 = arith.constant 0 : index
    %c0_18 = arith.constant 0 : index
    %35 = vector.load %arg8[%c0_17, %c0_18] : memref<8x128xf32, #tpu.memory_space<vmem>>, vector<8x128xf32>
    tpu.vector_store %arg8[%c0_17, %c0_18], %34 {strides = array<i32>} : memref<8x128xf32, #tpu.memory_space<vmem>>, vector<8x128xf32>,
    %c0_19 = arith.constant 0 : index
    %c0_20 = arith.constant 0 : index
    %36 = vector.load %arg1[%c0_19, %c0_20] : memref<8x128xf32, #tpu.memory_space<vmem>>, vector<8x128xf32>
    %37 = vector.shape_cast %36 : vector<8x128xf32> to vector<8x1x128xf32>
    %38 = vector.extract_strided_slice %0 {offsets = [0, 0, 0], sizes = [8, 7, 128], strides = [1, 1, 1]} : vector<8x8x128xf32> to vector<8x7x128xf32>
    %39 = tpu.concatenate %37, %38 in 1 : vector<8x1x128xf32>, vector<8x7x128xf32> -> vector<8x8x128xf32>
    %c0_21 = arith.constant 0 : index
    %c0_22 = arith.constant 0 : index
    %c0_23 = arith.constant 0 : index
    %40 = vector.load %arg9[%c0_21, %c0_22, %c0_23] : memref<8x8x128xf32, #tpu.memory_space<vmem>>, vector<8x8x128xf32>
    tpu.vector_store %arg9[%c0_21, %c0_22, %c0_23], %39 {strides = array<i32>} : memref<8x8x128xf32, #tpu.memory_space<vmem>>, vector<8x8x128xf32>,
    return
  }
  func.func @transform_0(%arg0: i32) -> (i32, i32) {
    %c0_i32 = arith.constant 0 : i32
    %c0_i32_0 = arith.constant 0 : i32
    return %arg0, %c0_i32 : i32, i32
  }
  func.func @transform_1(%arg0: i32) -> (i32, i32) {
    %c0_i32 = arith.constant 0 : i32
    %c0_i32_0 = arith.constant 0 : i32
    return %arg0, %c0_i32 : i32, i32
  }
  func.func @transform_2(%arg0: i32) -> (i32, i32, i32) {
    %c0_i32 = arith.constant 0 : i32
    %c0_i32_0 = arith.constant 0 : i32
    %c0_i32_1 = arith.constant 0 : i32
    return %arg0, %c0_i32, %c0_i32_0 : i32, i32, i32
  }
  func.func @transform_3(%arg0: i32) -> (i32, i32) {
    %c0_i32 = arith.constant 0 : i32
    %c0_i32_0 = arith.constant 0 : i32
    %c0_i32_1 = arith.constant 0 : i32
    return %c0_i32, %c0_i32_0 : i32, i32
  }
  func.func @transform_4(%arg0: i32) -> (i32, i32) {
    %c0_i32 = arith.constant 0 : i32
    %c0_i32_0 = arith.constant 0 : i32
    %c0_i32_1 = arith.constant 0 : i32
    return %c0_i32, %c0_i32_0 : i32, i32
  }
  func.func @transform_5(%arg0: i32) -> (i32, i32) {
    %c0_i32 = arith.constant 0 : i32
    %c0_i32_0 = arith.constant 0 : i32
    %c0_i32_1 = arith.constant 0 : i32
    return %c0_i32, %c0_i32_0 : i32, i32
  }
  func.func @transform_6(%arg0: i32) -> (i32, i32) {
    %c0_i32 = arith.constant 0 : i32
    %c0_i32_0 = arith.constant 0 : i32
    %c0_i32_1 = arith.constant 0 : i32
    return %c0_i32, %c0_i32_0 : i32, i32
  }
  func.func @transform_7(%arg0: i32) -> (i32, i32) {
    %c0_i32 = arith.constant 0 : i32
    %c0_i32_0 = arith.constant 0 : i32
    return %arg0, %c0_i32 : i32, i32
  }
  func.func @transform_8(%arg0: i32) -> (i32, i32, i32) {
    %c0_i32 = arith.constant 0 : i32
    %c0_i32_0 = arith.constant 0 : i32
    %c0_i32_1 = arith.constant 0 : i32
    return %arg0, %c0_i32, %c0_i32_0 : i32, i32, i32
  }
}

</mosaic_0001>

<llo_original>
// kernel: tpu_custom_call.1
$region0: #{tpu_custom_call.1}
  #allocation0 [shape = 'u32[]', space=smem, size = 0x4, offset = 0x4, fixed_abs, tag = 'smem constant byte address 0x4 - core index']
  #allocation1 [shape = 'u32[144,128]{1,0:T(1,128)}', space=vmem, size = 0x12000, scoped, tag = 'internal scratch']
  %s0 = inlined_call_operand.hbm [shape: f32[16,128], index: 0, kind: input, shape index: {}]
  %s1 = inlined_call_operand.hbm [shape: f32[16,128], index: 1, kind: input, shape index: {}]
  %s2 = inlined_call_operand.hbm [shape: f32[16,8,128], index: 2, kind: input, shape index: {}, may-alias: {2,8}]
  %s3 = inlined_call_operand.vmem [shape: f32[128,128], index: 3, kind: input, shape index: {}]
  %s4 = inlined_call_operand.vmem [shape: f32[128,128], index: 4, kind: input, shape index: {}]
  %s5 = inlined_call_operand.hbm [shape: f32[8,128], index: 5, kind: input, shape index: {}]
  %s6 = inlined_call_operand.hbm [shape: f32[8,128], index: 6, kind: input, shape index: {}]
  %s7 = inlined_call_operand.hbm [shape: f32[16,128], index: 7, kind: output, shape index: {0}]
  %s8 = inlined_call_operand.hbm [shape: f32[16,8,128], index: 8, kind: output, shape index: {1}, may-alias: {2,8}]
  %9 = xla_tuple %s7, %s8
  %s10 = sld [smem:[#allocation0]]
  $region89: #{tpu_custom_call.1} parent=0
    _
  %s12 = ssub.s32 1, %s10
  %s13 = scalar_select 0, %s12, %s10
  $region1: #{tpu_custom_call.1} parent=0
    #allocation2 [shape = 'u8[8192]{0}', space=vmem, size = 0x2000, scoped, tag = 'input window, operand 0']
    #allocation3 [shape = 's32[2]{0}', space=sflag, size = 0x8, scoped, tag = 'scoped memory for tpu_custom_call.1']
    #allocation4 [shape = 's32[2]{0}', space=sflag, size = 0x8, scoped, tag = 'scoped memory for tpu_custom_call.1']
    #allocation5 [shape = 'u8[8192]{0}', space=vmem, size = 0x2000, scoped, tag = 'input window, operand 1']
    #allocation6 [shape = 's32[2]{0}', space=sflag, size = 0x8, scoped, tag = 'scoped memory for tpu_custom_call.1']
    #allocation7 [shape = 'u8[65536]{0}', space=vmem, size = 0x10000, scoped, tag = 'input window, operand 2']
    #allocation8 [shape = 'u8[4096]{0}', space=vmem, size = 0x1000, scoped, tag = 'input window, operand 5, single buffered']
    #allocation9 [shape = 's32[1]{0}', space=sflag, size = 0x4, scoped, tag = 'scoped memory for tpu_custom_call.1']
    #allocation10 [shape = 'u8[4096]{0}', space=vmem, size = 0x1000, scoped, tag = 'input window, operand 6, single buffered']
    #allocation11 [shape = 'u8[8192]{0}', space=vmem, size = 0x2000, scoped, tag = 'output window, operand 0']
    #allocation12 [shape = 'u8[65536]{0}', space=vmem, size = 0x10000, scoped, tag = 'output window, operand 1']
    #allocation13 [shape = 's32[2]{0}', space=sflag, size = 0x8, scoped, tag = 'scoped memory for tpu_custom_call.1']
    %14 = vsyncpa [#allocation3], 0
    %s15 = scalar_lea.sflag [#allocation3], 1
    %16 = vsyncpa %s15, 0
    %17 = vsyncpa [#allocation6], 0
    %s18 = scalar_lea.sflag [#allocation6], 1
    %19 = vsyncpa %s18, 0
    %20 = vsyncpa [#allocation9], 0
    %21 = vsyncpa [#allocation4], 0
    %s22 = scalar_lea.sflag [#allocation4], 1
    %23 = vsyncpa %s22, 0
    %24 = vsyncpa [#allocation13], 0
    %s25 = scalar_lea.sflag [#allocation13], 1
    %26 = vsyncpa %s25, 0
    loop: start=0, step=1, limit=4
    $region2: #{tpu_custom_call.1} parent=1 // loop_pre_header
      _
    $region3: #{tpu_custom_call.1} parent=1 // loop_header
      %s28 = sphi 0, %s32
      %p29 = scmp.ge.s32.totalorder %s28, 4
      %s38 = sphi 0, %s40
      %s41 = sphi 0, %s38
      %s42 = sphi 0, %s41
      %s58 = sphi 0, %s42
      %s64 = sphi 0, %s66
      %s67 = sphi 0, %s64
      %s68 = sphi 0, %s67
      %s84 = sphi 0, %s68
      %s90 = sphi 0, %s92
      %s93 = sphi 0, %s90
      %s94 = sphi 0, %s93
      %s110 = sphi 0, %s94
      %s114 = sphi 0, %s114
      %s116 = sphi 0, %s114
      %s117 = sphi 0, %s116
      %s131 = sphi 0, %s117
      %s135 = sphi 0, %s135
      %s137 = sphi 0, %s135
      %s138 = sphi 0, %s137
      %s152 = sphi 0, %s138
      %s156 = sphi 0, %s156
      %s158 = sphi 0, %s156
      %s159 = sphi 0, %s158
      %s173 = sphi 0, %s159
      %s177 = sphi 0, %s177
      %s179 = sphi 0, %s177
      %s180 = sphi 0, %s179
      %s194 = sphi 0, %s180
      %s200 = sphi 0, %s202
      %s203 = sphi 0, %s200
      %s204 = sphi 0, %s203
      %s220 = sphi 0, %s204
      %s226 = sphi 0, %s228
      %s229 = sphi 0, %s226
      %s230 = sphi 0, %s229
      %s246 = sphi 0, %s230
    $region4: #{tpu_custom_call.1} parent=1 // loop_header_branch
      %31 = sbr.rel (%p29) target = $region8
    $region5: #{tpu_custom_call.1} parent=1 // loop_body
      %s33 = ssub.s32 %s28, 1
      %s34 = ssub.s32 %s28, 2
      %s35 = sadd.s32 %s28, 1
      %s36 = ssub.s32 %s28, %s35
      %p37 = scmp.eq.s32.totalorder %s36, 0
      %s39 = sadd.s32 %s38, 1
      %s40 = scalar_select %p37, %s38, %s39
      %p43 = pneg %p37
      %p44 = scmp.eq.s32.totalorder %s28, 1
      %p45 = por %p43, %p44
      %p46 = scmp.ne.s32.totalorder %s38, %s41
      %p47 = scmp.eq.s32.totalorder %s28, 0
      %p48 = por %p46, %p47
      %p49 = scmp.ne.s32.totalorder %s38, %s41
      %p50 = scmp.eq.s32.totalorder %s33, 1
      %p51 = por %p49, %p50
      %p52 = scmp.ne.s32.totalorder %s41, %s42
      %p53 = scmp.eq.s32.totalorder %s33, 0
      %p54 = por %p52, %p53
      %p55 = scmp.ne.s32.totalorder %s41, %s42
      %p56 = scmp.eq.s32.totalorder %s34, 1
      %p57 = por %p55, %p56
      %p59 = scmp.ne.s32.totalorder %s42, %s58
      %p60 = scmp.eq.s32.totalorder %s34, 0
      %p61 = por %p59, %p60
      %s62 = ssub.s32 %s28, %s35
      %p63 = scmp.eq.s32.totalorder %s62, 0
      %s65 = sadd.s32 %s64, 1
      %s66 = scalar_select %p63, %s64, %s65
      %p69 = pneg %p63
      %p70 = scmp.eq.s32.totalorder %s28, 1
      %p71 = por %p69, %p70
      %p72 = scmp.ne.s32.totalorder %s64, %s67
      %p73 = scmp.eq.s32.totalorder %s28, 0
      %p74 = por %p72, %p73
      %p75 = scmp.ne.s32.totalorder %s64, %s67
      %p76 = scmp.eq.s32.totalorder %s33, 1
      %p77 = por %p75, %p76
      %p78 = scmp.ne.s32.totalorder %s67, %s68
      %p79 = scmp.eq.s32.totalorder %s33, 0
      %p80 = por %p78, %p79
      %p81 = scmp.ne.s32.totalorder %s67, %s68
      %p82 = scmp.eq.s32.totalorder %s34, 1
      %p83 = por %p81, %p82
      %p85 = scmp.ne.s32.totalorder %s68, %s84
      %p86 = scmp.eq.s32.totalorder %s34, 0
      %p87 = por %p85, %p86
      %s88 = ssub.s32 %s28, %s35
      %p89 = scmp.eq.s32.totalorder %s88, 0
      %s91 = sadd.s32 %s90, 1
      %s92 = scalar_select %p89, %s90, %s91
      %p95 = pneg %p89
      %p96 = scmp.eq.s32.totalorder %s28, 1
      %p97 = por %p95, %p96
      %p98 = scmp.ne.s32.totalorder %s90, %s93
      %p99 = scmp.eq.s32.totalorder %s28, 0
      %p100 = por %p98, %p99
      %p101 = scmp.ne.s32.totalorder %s90, %s93
      %p102 = scmp.eq.s32.totalorder %s33, 1
      %p103 = por %p101, %p102
      %p104 = scmp.ne.s32.totalorder %s93, %s94
      %p105 = scmp.eq.s32.totalorder %s33, 0
      %p106 = por %p104, %p105
      %p107 = scmp.ne.s32.totalorder %s93, %s94
      %p108 = scmp.eq.s32.totalorder %s34, 1
      %p109 = por %p107, %p108
      %p111 = scmp.ne.s32.totalorder %s94, %s110
      %p112 = scmp.eq.s32.totalorder %s34, 0
      %p113 = por %p111, %p112
      %s115 = sadd.s32 %s114, 1
      %p118 = scmp.eq.s32.totalorder %s28, 1
      %p119 = scmp.ne.s32.totalorder %s114, %s116
      %p120 = scmp.eq.s32.totalorder %s28, 0
      %p121 = por %p119, %p120
      %p122 = scmp.ne.s32.totalorder %s114, %s116
      %p123 = scmp.eq.s32.totalorder %s33, 1
      %p124 = por %p122, %p123
      %p125 = scmp.ne.s32.totalorder %s116, %s117
      %p126 = scmp.eq.s32.totalorder %s33, 0
      %p127 = por %p125, %p126
      %p128 = scmp.ne.s32.totalorder %s116, %s117
      %p129 = scmp.eq.s32.totalorder %s34, 1
      %p130 = por %p128, %p129
      %p132 = scmp.ne.s32.totalorder %s117, %s131
      %p133 = scmp.eq.s32.totalorder %s34, 0
      %p134 = por %p132, %p133
      %s136 = sadd.s32 %s135, 1
      %p139 = scmp.eq.s32.totalorder %s28, 1
      %p140 = scmp.ne.s32.totalorder %s135, %s137
      %p141 = scmp.eq.s32.totalorder %s28, 0
      %p142 = por %p140, %p141
      %p143 = scmp.ne.s32.totalorder %s135, %s137
      %p144 = scmp.eq.s32.totalorder %s33, 1
      %p145 = por %p143, %p144
      %p146 = scmp.ne.s32.totalorder %s137, %s138
      %p147 = scmp.eq.s32.totalorder %s33, 0
      %p148 = por %p146, %p147
      %p149 = scmp.ne.s32.totalorder %s137, %s138
      %p150 = scmp.eq.s32.totalorder %s34, 1
      %p151 = por %p149, %p150
      %p153 = scmp.ne.s32.totalorder %s138, %s152
      %p154 = scmp.eq.s32.totalorder %s34, 0
      %p155 = por %p153, %p154
      %s157 = sadd.s32 %s156, 1
      %p160 = scmp.eq.s32.totalorder %s28, 1
      %p161 = scmp.ne.s32.totalorder %s156, %s158
      %p162 = scmp.eq.s32.totalorder %s28, 0
      %p163 = por %p161, %p162
      %p164 = scmp.ne.s32.totalorder %s156, %s158
      %p165 = scmp.eq.s32.totalorder %s33, 1
      %p166 = por %p164, %p165
      %p167 = scmp.ne.s32.totalorder %s158, %s159
      %p168 = scmp.eq.s32.totalorder %s33, 0
      %p169 = por %p167, %p168
      %p170 = scmp.ne.s32.totalorder %s158, %s159
      %p171 = scmp.eq.s32.totalorder %s34, 1
      %p172 = por %p170, %p171
      %p174 = scmp.ne.s32.totalorder %s159, %s173
      %p175 = scmp.eq.s32.totalorder %s34, 0
      %p176 = por %p174, %p175
      %s178 = sadd.s32 %s177, 1
      %p181 = scmp.eq.s32.totalorder %s28, 1
      %p182 = scmp.ne.s32.totalorder %s177, %s179
      %p183 = scmp.eq.s32.totalorder %s28, 0
      %p184 = por %p182, %p183
      %p185 = scmp.ne.s32.totalorder %s177, %s179
      %p186 = scmp.eq.s32.totalorder %s33, 1
      %p187 = por %p185, %p186
      %p188 = scmp.ne.s32.totalorder %s179, %s180
      %p189 = scmp.eq.s32.totalorder %s33, 0
      %p190 = por %p188, %p189
      %p191 = scmp.ne.s32.totalorder %s179, %s180
      %p192 = scmp.eq.s32.totalorder %s34, 1
      %p193 = por %p191, %p192
      %p195 = scmp.ne.s32.totalorder %s180, %s194
      %p196 = scmp.eq.s32.totalorder %s34, 0
      %p197 = por %p195, %p196
      %s198 = ssub.s32 %s28, %s35
      %p199 = scmp.eq.s32.totalorder %s198, 0
      %s201 = sadd.s32 %s200, 1
      %s202 = scalar_select %p199, %s200, %s201
      %p205 = pneg %p199
      %p206 = scmp.eq.s32.totalorder %s28, 1
      %p207 = por %p205, %p206
      %p208 = scmp.ne.s32.totalorder %s200, %s203
      %p209 = scmp.eq.s32.totalorder %s28, 0
      %p210 = por %p208, %p209
      %p211 = scmp.ne.s32.totalorder %s200, %s203
      %p212 = scmp.eq.s32.totalorder %s33, 1
      %p213 = por %p211, %p212
      %p214 = scmp.ne.s32.totalorder %s203, %s204
      %p215 = scmp.eq.s32.totalorder %s33, 0
      %p216 = por %p214, %p215
      %p217 = scmp.ne.s32.totalorder %s203, %s204
      %p218 = scmp.eq.s32.totalorder %s34, 1
      %p219 = por %p217, %p218
      %p221 = scmp.ne.s32.totalorder %s204, %s220
      %p222 = scmp.eq.s32.totalorder %s34, 0
      %p223 = por %p221, %p222
      %s224 = ssub.s32 %s28, %s35
      %p225 = scmp.eq.s32.totalorder %s224, 0
      %s227 = sadd.s32 %s226, 1
      %s228 = scalar_select %p225, %s226, %s227
      %p231 = pneg %p225
      %p232 = scmp.eq.s32.totalorder %s28, 1
      %p233 = por %p231, %p232
      %p234 = scmp.ne.s32.totalorder %s226, %s229
      %p235 = scmp.eq.s32.totalorder %s28, 0
      %p236 = por %p234, %p235
      %p237 = scmp.ne.s32.totalorder %s226, %s229
      %p238 = scmp.eq.s32.totalorder %s33, 1
      %p239 = por %p237, %p238
      %p240 = scmp.ne.s32.totalorder %s229, %s230
      %p241 = scmp.eq.s32.totalorder %s33, 0
      %p242 = por %p240, %p241
      %p243 = scmp.ne.s32.totalorder %s229, %s230
      %p244 = scmp.eq.s32.totalorder %s34, 1
      %p245 = por %p243, %p244
      %p247 = scmp.ne.s32.totalorder %s230, %s246
      %p248 = scmp.eq.s32.totalorder %s34, 0
      %p249 = por %p247, %p248
      %p250 = scmp.le.s32.totalorder 1, %s28
      %p251 = scmp.lt.s32.totalorder %s28, 3
      %p252 = pnand %p250, %p251
      %p253 = pneg %p252
      // Predicated region
      $region9: #{tpu_custom_call.1} parent=5 // pred_check
        _
      $region10: #{tpu_custom_call.1} parent=5 // pred_check_branch
        %255 = sbr.rel (%p252) target = $region12
      $region11: #{tpu_custom_call.1} parent=5 // pred_region
        %s256 = ssub.s32 %s28, 1
        // Predicated region
        $region13: #{tpu_custom_call.1} parent=11 // pred_check
          %p257 = pneg %p127
        $region14: #{tpu_custom_call.1} parent=11 // pred_check_branch
          %259 = sbr.rel (%p257) target = $region16
        $region15: #{tpu_custom_call.1} parent=11 // pred_region
          _
        $region16: #{tpu_custom_call.1} parent=11 // pred_fallthru
          _
        // Predicated region
        $region17: #{tpu_custom_call.1} parent=11 // pred_check
          %p260 = pneg %p148
        $region18: #{tpu_custom_call.1} parent=11 // pred_check_branch
          %262 = sbr.rel (%p260) target = $region20
        $region19: #{tpu_custom_call.1} parent=11 // pred_region
          _
        $region20: #{tpu_custom_call.1} parent=11 // pred_fallthru
          _
        // Predicated region
        $region21: #{tpu_custom_call.1} parent=11 // pred_check
          %p263 = pneg %p169
        $region22: #{tpu_custom_call.1} parent=11 // pred_check_branch
          %265 = sbr.rel (%p263) target = $region24
        $region23: #{tpu_custom_call.1} parent=11 // pred_region
          %s267 = ssub.s32 128, 128
          %268 = vsyncadd [#allocation9], %s267
          %s270 = sshll.u32 [#allocation8], 4
          %s271 = int_to_ptr.vmem [resolvable:$true] %s270
          %273 = dma.hbm_to_vmem [thread:$0]  %s5, 128, %s271, [#allocation9]
        $region24: #{tpu_custom_call.1} parent=11 // pred_fallthru
          _
        // Predicated region
        $region25: #{tpu_custom_call.1} parent=11 // pred_check
          %p274 = pneg %p190
        $region26: #{tpu_custom_call.1} parent=11 // pred_check_branch
          %276 = sbr.rel (%p274) target = $region28
        $region27: #{tpu_custom_call.1} parent=11 // pred_region
          %s278 = ssub.s32 128, 128
          %279 = vsyncadd [#allocation9], %s278
          %s281 = sshll.u32 [#allocation10], 4
          %s282 = int_to_ptr.vmem [resolvable:$true] %s281
          %284 = dma.hbm_to_vmem [thread:$0]  %s6, 128, %s282, [#allocation9]
        $region28: #{tpu_custom_call.1} parent=11 // pred_fallthru
          _
      $region12: #{tpu_custom_call.1} parent=5 // pred_fallthru
        _
      %p285 = scmp.lt.s32.totalorder %s28, 2
      // Predicated region
      $region29: #{tpu_custom_call.1} parent=5 // pred_check
        %p286 = pneg %p285
      $region30: #{tpu_custom_call.1} parent=5 // pred_check_branch
        %288 = sbr.rel (%p286) target = $region32
      $region31: #{tpu_custom_call.1} parent=5 // pred_region
        // Predicated region
        $region33: #{tpu_custom_call.1} parent=31 // pred_check
          %p289 = pneg %p48
        $region34: #{tpu_custom_call.1} parent=31 // pred_check_branch
          %291 = sbr.rel (%p289) target = $region36
        $region35: #{tpu_custom_call.1} parent=31 // pred_region
          %s292 = sand.u32 %s38, 1
          %s293 = scalar_lea.sflag [#allocation3], %s292
          %s294 = sand.u32 %s38, 1
          %s295 = smul.addr %s294, 8
          %s296 = scalar_lea.vmem [#allocation2], %s295
          %s298 = ssub.s32 128, 128
          %299 = vsyncadd %s293, %s298
          %s300 = smul.addr %s28, 128
          %s301 = scalar_lea.hbm %s0, %s300
          %s303 = sshll.u32 %s296, 4
          %s304 = int_to_ptr.vmem [resolvable:$true] %s303
          %306 = dma.hbm_to_vmem [thread:$0]  %s301, 128, %s304, %s293
        $region36: #{tpu_custom_call.1} parent=31 // pred_fallthru
          _
        // Predicated region
        $region37: #{tpu_custom_call.1} parent=31 // pred_check
          %p307 = pneg %p74
        $region38: #{tpu_custom_call.1} parent=31 // pred_check_branch
          %309 = sbr.rel (%p307) target = $region40
        $region39: #{tpu_custom_call.1} parent=31 // pred_region
          %s310 = sand.u32 %s28, 1
          %s311 = scalar_lea.sflag [#allocation6], %s310
          %s312 = sand.u32 %s64, 1
          %s313 = smul.addr %s312, 8
          %s314 = scalar_lea.vmem [#allocation5], %s313
          %s316 = ssub.s32 128, 128
          %317 = vsyncadd %s311, %s316
          %s318 = smul.addr %s28, 128
          %s319 = scalar_lea.hbm %s1, %s318
          %s321 = sshll.u32 %s314, 4
          %s322 = int_to_ptr.vmem [resolvable:$true] %s321
          %324 = dma.hbm_to_vmem [thread:$0]  %s319, 128, %s322, %s311
        $region40: #{tpu_custom_call.1} parent=31 // pred_fallthru
          _
        // Predicated region
        $region41: #{tpu_custom_call.1} parent=31 // pred_check
          %p325 = pneg %p100
        $region42: #{tpu_custom_call.1} parent=31 // pred_check_branch
          %327 = sbr.rel (%p325) target = $region44
        $region43: #{tpu_custom_call.1} parent=31 // pred_region
          %s328 = sand.u32 %s28, 1
          %s329 = scalar_lea.sflag [#allocation6], %s328
          %s330 = sand.u32 %s90, 1
          %s331 = smul.addr %s330, 64
          %s332 = scalar_lea.vmem [#allocation7], %s331
          %s333 = smul.u32 8, %s28
          %s335 = ssub.s32 1024, 1024
          %336 = vsyncadd %s329, %s335
          %s337 = smul.addr %s333, 128
          %s338 = scalar_lea.hbm %s2, %s337
          %s339 = sshll.u32 %s332, 4
          %s340 = int_to_ptr.vmem [resolvable:$true] %s339
          %345 = dma.hbm_to_vmem [thread:$0]  %s338, 1024, %s340, %s329, 128, 128, 8
        $region44: #{tpu_custom_call.1} parent=31 // pred_fallthru
          _
      $region32: #{tpu_custom_call.1} parent=5 // pred_fallthru
        _
      %p346 = scmp.le.s32.totalorder 1, %s28
      %p347 = scmp.lt.s32.totalorder %s28, 3
      %p348 = pnand %p346, %p347
      %p349 = pneg %p348
      // Predicated region
      $region45: #{tpu_custom_call.1} parent=5 // pred_check
        _
      $region46: #{tpu_custom_call.1} parent=5 // pred_check_branch
        %351 = sbr.rel (%p348) target = $region48
      $region47: #{tpu_custom_call.1} parent=5 // pred_region
        %s352 = ssub.s32 %s28, 1
        %s353 = sand.u32 %s41, 1
        %s354 = scalar_lea.sflag [#allocation3], %s353
        %s355 = sand.u32 %s41, 1
        %s356 = smul.addr %s355, 8
        %s357 = scalar_lea.vmem [#allocation2], %s356
        // Predicated region
        $region49: #{tpu_custom_call.1} parent=47 // pred_check
          %p358 = pneg %p54
        $region50: #{tpu_custom_call.1} parent=47 // pred_check_branch
          %360 = sbr.rel (%p358) target = $region52
        $region51: #{tpu_custom_call.1} parent=47 // pred_region
          %361 = dma.done %s354, 128
        $region52: #{tpu_custom_call.1} parent=47 // pred_fallthru
          _
        %s362 = sand.u32 %s33, 1
        %s363 = scalar_lea.sflag [#allocation6], %s362
        %s364 = sand.u32 %s67, 1
        %s365 = smul.addr %s364, 8
        %s366 = scalar_lea.vmem [#allocation5], %s365
        // Predicated region
        $region53: #{tpu_custom_call.1} parent=47 // pred_check
          %p367 = pneg %p80
        $region54: #{tpu_custom_call.1} parent=47 // pred_check_branch
          %369 = sbr.rel (%p367) target = $region56
        $region55: #{tpu_custom_call.1} parent=47 // pred_region
          %370 = dma.done %s363, 128
        $region56: #{tpu_custom_call.1} parent=47 // pred_fallthru
          _
        %s371 = sand.u32 %s33, 1
        %s372 = scalar_lea.sflag [#allocation6], %s371
        %s373 = sand.u32 %s93, 1
        %s374 = smul.addr %s373, 64
        %s375 = scalar_lea.vmem [#allocation7], %s374
        // Predicated region
        $region57: #{tpu_custom_call.1} parent=47 // pred_check
          %p376 = pneg %p106
        $region58: #{tpu_custom_call.1} parent=47 // pred_check_branch
          %378 = sbr.rel (%p376) target = $region60
        $region59: #{tpu_custom_call.1} parent=47 // pred_region
          %379 = dma.done %s372, 1024
        $region60: #{tpu_custom_call.1} parent=47 // pred_fallthru
          _
        // Predicated region
        $region61: #{tpu_custom_call.1} parent=47 // pred_check
          %p380 = pneg %p169
        $region62: #{tpu_custom_call.1} parent=47 // pred_check_branch
          %382 = sbr.rel (%p380) target = $region64
        $region63: #{tpu_custom_call.1} parent=47 // pred_region
          %383 = dma.done [#allocation9], 128
        $region64: #{tpu_custom_call.1} parent=47 // pred_fallthru
          _
        // Predicated region
        $region65: #{tpu_custom_call.1} parent=47 // pred_check
          %p384 = pneg %p190
        $region66: #{tpu_custom_call.1} parent=47 // pred_check_branch
          %386 = sbr.rel (%p384) target = $region68
        $region67: #{tpu_custom_call.1} parent=47 // pred_region
          %387 = dma.done [#allocation9], 128
        $region68: #{tpu_custom_call.1} parent=47 // pred_fallthru
          _
        %s388 = sand.u32 %s41, 1
        %s389 = scalar_lea.sflag [#allocation3], %s388
        %s390 = sand.u32 %s41, 1
        %s391 = smul.addr %s390, 8
        %s392 = scalar_lea.vmem [#allocation2], %s391
        %p393 = pneg %p54
        %p394 = pneg %p51
        %s395 = sand.u32 %s33, 1
        %s396 = scalar_lea.sflag [#allocation6], %s395
        %s397 = sand.u32 %s67, 1
        %s398 = smul.addr %s397, 8
        %s399 = scalar_lea.vmem [#allocation5], %s398
        %p400 = pneg %p80
        %p401 = pneg %p77
        %s402 = sand.u32 %s33, 1
        %s403 = scalar_lea.sflag [#allocation6], %s402
        %s404 = sand.u32 %s93, 1
        %s405 = smul.addr %s404, 64
        %s406 = scalar_lea.vmem [#allocation7], %s405
        %p407 = pneg %p106
        %p408 = pneg %p103
        %p409 = pneg %p127
        %p410 = pneg %p124
        %p411 = pneg %p148
        %p412 = pneg %p145
        %p413 = pneg %p169
        %p414 = pneg %p166
        %p415 = pneg %p190
        %p416 = pneg %p187
        %p417 = pneg %p216
        %p418 = pneg %p213
        %s419 = sand.u32 %s203, 1
        %s420 = scalar_lea.sflag [#allocation4], %s419
        %s421 = sand.u32 %s203, 1
        %s422 = smul.addr %s421, 8
        %s423 = scalar_lea.vmem [#allocation11], %s422
        %p424 = pneg %p242
        %p425 = pneg %p239
        %s426 = sand.u32 %s229, 1
        %s427 = scalar_lea.sflag [#allocation13], %s426
        %s428 = sand.u32 %s229, 1
        %s429 = smul.addr %s428, 64
        %s430 = scalar_lea.vmem [#allocation12], %s429
        %s431 = smul.u32 8, %s33
        %s432 = smul.u32 8, %s33
        %v433 = vld [vmem:[%s375] sm:$0xff]
        %v434 = vld [vmem:[%s375 + $0x8] sm:$0xff]
        %v435 = vld [vmem:[%s375 + $0x10] sm:$0xff]
        %v436 = vld [vmem:[%s375 + $0x18] sm:$0xff]
        %v437 = vld [vmem:[%s375 + $0x20] sm:$0xff]
        %v438 = vld [vmem:[%s375 + $0x28] sm:$0xff]
        %v439 = vld [vmem:[%s375 + $0x30] sm:$0xff]
        %v440 = vld [vmem:[%s375 + $0x38] sm:$0xff]
        %v441 = vld [vmem:[%s3] sm:$0xff]
        %v442 = vld [vmem:[%s3 + $0x8] sm:$0xff]
        %v443 = vld [vmem:[%s3 + $0x10] sm:$0xff]
        %v444 = vld [vmem:[%s3 + $0x18] sm:$0xff]
        %v445 = vld [vmem:[%s3 + $0x20] sm:$0xff]
        %v446 = vld [vmem:[%s3 + $0x28] sm:$0xff]
        %v447 = vld [vmem:[%s3 + $0x30] sm:$0xff]
        %v448 = vld [vmem:[%s3 + $0x38] sm:$0xff]
        %v449 = vld [vmem:[%s3 + $0x40] sm:$0xff]
        %v450 = vld [vmem:[%s3 + $0x48] sm:$0xff]
        %v451 = vld [vmem:[%s3 + $0x50] sm:$0xff]
        %v452 = vld [vmem:[%s3 + $0x58] sm:$0xff]
        %v453 = vld [vmem:[%s3 + $0x60] sm:$0xff]
        %v454 = vld [vmem:[%s3 + $0x68] sm:$0xff]
        %v455 = vld [vmem:[%s3 + $0x70] sm:$0xff]
        %v456 = vld [vmem:[%s3 + $0x78] sm:$0xff]
        %457 = vmatprep.subr.mxu0 0.0
        %458 = vmatpush1.msra.mxu0 %v456
        %459 = vmatprep.subr.mxu0 0.0
        %460 = vmatpush1.msra.mxu0 %v455
        %461 = vmatprep.subr.mxu0 0.0
        %462 = vmatpush1.msra.mxu0 %v454
        %463 = vmatprep.subr.mxu0 0.0
        %464 = vmatpush1.msra.mxu0 %v453
        %465 = vmatprep.subr.mxu0 0.0
        %466 = vmatpush1.msra.mxu0 %v452
        %467 = vmatprep.subr.mxu0 0.0
        %468 = vmatpush1.msra.mxu0 %v451
        %469 = vmatprep.subr.mxu0 0.0
        %470 = vmatpush1.msra.mxu0 %v450
        %471 = vmatprep.subr.mxu0 0.0
        %472 = vmatpush1.msra.mxu0 %v449
        %473 = vmatprep.subr.mxu0 0.0
        %474 = vmatpush1.msra.mxu0 %v448
        %475 = vmatprep.subr.mxu0 0.0
        %476 = vmatpush1.msra.mxu0 %v447
        %477 = vmatprep.subr.mxu0 0.0
        %478 = vmatpush1.msra.mxu0 %v446
        %479 = vmatprep.subr.mxu0 0.0
        %480 = vmatpush1.msra.mxu0 %v445
        %481 = vmatprep.subr.mxu0 0.0
        %482 = vmatpush1.msra.mxu0 %v444
        %483 = vmatprep.subr.mxu0 0.0
        %484 = vmatpush1.msra.mxu0 %v443
        %485 = vmatprep.subr.mxu0 0.0
        %486 = vmatpush1.msra.mxu0 %v442
        %487 = vmatprep.subr.mxu0 0.0
        %488 = vmatpush1.msra.mxu0 %v441
        %489 = vmatprep.subr.mxu0 0.0
        %490 = vmatpush2.msra.mxu0 0.0
        %491 = vmatprep.subr.mxu0 0.0
        %492 = vmatpush2.msra.mxu0 0.0
        %493 = vmatprep.subr.mxu0 0.0
        %494 = vmatpush2.msra.mxu0 0.0
        %495 = vmatprep.subr.mxu0 0.0
        %496 = vmatpush2.msra.mxu0 0.0
        %497 = vmatprep.subr.mxu0 0.0
        %498 = vmatpush2.msra.mxu0 0.0
        %499 = vmatprep.subr.mxu0 0.0
        %500 = vmatpush2.msra.mxu0 0.0
        %501 = vmatprep.subr.mxu0 0.0
        %502 = vmatpush2.msra.mxu0 0.0
        %503 = vmatprep.subr.mxu0 0.0
        %504 = vmatpush2.msra.mxu0 0.0
        %505 = vmatprep.subr.mxu0 0.0
        %506 = vmatpush2.msra.mxu0 0.0
        %507 = vmatprep.subr.mxu0 0.0
        %508 = vmatpush2.msra.mxu0 0.0
        %509 = vmatprep.subr.mxu0 0.0
        %510 = vmatpush2.msra.mxu0 0.0
        %511 = vmatprep.subr.mxu0 0.0
        %512 = vmatpush2.msra.mxu0 0.0
        %513 = vmatprep.subr.mxu0 0.0
        %514 = vmatpush2.msra.mxu0 0.0
        %515 = vmatprep.subr.mxu0 0.0
        %516 = vmatpush2.msra.mxu0 0.0
        %517 = vmatprep.subr.mxu0 0.0
        %518 = vmatpush2.msra.mxu0 0.0
        %519 = vmatprep.subr.mxu0 0.0
        %520 = vmatpush2.msra.mxu0 0.0
        %521 = vmatprep.mubr.f32.mxu0 0.0
        %522 = vmatmul.mubr.f32.gmra.mxu0 %v433
        %v523 = vpop.f32.mrf.mxu0
        %v524 = vadd.f32 0.0, %v523
        %v525 = vpop.f32.mrf.mxu0
        %526 = vmatprep.mubr.f32.mxu0 0.0
        %527 = vmatmul.mubr.f32.gmra.mxu0 %v434
        %v528 = vpop.f32.mrf.mxu0
        %v529 = vadd.f32 0.0, %v528
        %v530 = vpop.f32.mrf.mxu0
        %531 = vmatprep.mubr.f32.mxu0 0.0
        %532 = vmatmul.mubr.f32.gmra.mxu0 %v435
        %v533 = vpop.f32.mrf.mxu0
        %v534 = vadd.f32 0.0, %v533
        %v535 = vpop.f32.mrf.mxu0
        %536 = vmatprep.mubr.f32.mxu0 0.0
        %537 = vmatmul.mubr.f32.gmra.mxu0 %v436
        %v538 = vpop.f32.mrf.mxu0
        %v539 = vadd.f32 0.0, %v538
        %v540 = vpop.f32.mrf.mxu0
        %541 = vmatprep.mubr.f32.mxu0 0.0
        %542 = vmatmul.mubr.f32.gmra.mxu0 %v437
        %v543 = vpop.f32.mrf.mxu0
        %v544 = vadd.f32 0.0, %v543
        %v545 = vpop.f32.mrf.mxu0
        %546 = vmatprep.mubr.f32.mxu0 0.0
        %547 = vmatmul.mubr.f32.gmra.mxu0 %v438
        %v548 = vpop.f32.mrf.mxu0
        %v549 = vadd.f32 0.0, %v548
        %v550 = vpop.f32.mrf.mxu0
        %551 = vmatprep.mubr.f32.mxu0 0.0
        %552 = vmatmul.mubr.f32.gmra.mxu0 %v439
        %v553 = vpop.f32.mrf.mxu0
        %v554 = vadd.f32 0.0, %v553
        %v555 = vpop.f32.mrf.mxu0
        %556 = vmatprep.mubr.f32.mxu0 0.0
        %557 = vmatmul.mubr.f32.gmra.mxu0 %v440
        %v558 = vpop.f32.mrf.mxu0
        %v559 = vadd.f32 0.0, %v558
        %v560 = vpop.f32.mrf.mxu0
        %561 = vdwg.mxu0
        %v562 = vld [vmem:[#allocation8] sm:$0xff]
        %v563 = vadd.f32 %v524, %v562
        %v564 = vadd.f32 %v529, %v562
        %v565 = vadd.f32 %v534, %v562
        %v566 = vadd.f32 %v539, %v562
        %v567 = vadd.f32 %v544, %v562
        %v568 = vadd.f32 %v549, %v562
        %v569 = vadd.f32 %v554, %v562
        %v570 = vadd.f32 %v559, %v562
        %v571 = vld [vmem:[%s366] sm:$0xff]
        %v573 = vcombine.high %v571, %v571
        %v575 = vunpack.c.l.s4 1966171168
        %v576 = vunpack.c.0.s8 %v575
        %v577 = vlaneseq
        %v578 = vshrl.u32 %v577, 7
        %v579 = vsub.s32 %v576, %v578
        %v580 = vrot.slane %v571, %v579
        %v582 = vunpack.c.l.s4 1966171168
        %v583 = vunpack.c.0.s8 %v582
        %v584 = vlaneseq
        %v585 = vshrl.u32 %v584, 7
        %v586 = vsub.s32 %v583, %v585
        %v587 = vrot.slane %v573, %v586
        %v588 = vcombine.high %v580, %v580
        %v589 = vcombine.high %v587, %v587
        %v591 = vunpack.c.l.s4 1966171168
        %v592 = vunpack.c.0.s8 %v591
        %v593 = vlaneseq
        %v594 = vshrl.u32 %v593, 7
        %v595 = vsub.s32 %v592, %v594
        %v596 = vrot.slane %v580, %v595
        %v598 = vunpack.c.l.s4 1966171168
        %v599 = vunpack.c.0.s8 %v598
        %v600 = vlaneseq
        %v601 = vshrl.u32 %v600, 7
        %v602 = vsub.s32 %v599, %v601
        %v603 = vrot.slane %v587, %v602
        %v605 = vunpack.c.l.s4 1966171168
        %v606 = vunpack.c.0.s8 %v605
        %v607 = vlaneseq
        %v608 = vshrl.u32 %v607, 7
        %v609 = vsub.s32 %v606, %v608
        %v610 = vrot.slane %v588, %v609
        %v612 = vunpack.c.l.s4 1966171168
        %v613 = vunpack.c.0.s8 %v612
        %v614 = vlaneseq
        %v615 = vshrl.u32 %v614, 7
        %v616 = vsub.s32 %v613, %v615
        %v617 = vrot.slane %v589, %v616
        %v618 = vcombine.high %v596, %v596
        %v619 = vcombine.high %v603, %v603
        %v620 = vcombine.high %v610, %v610
        %v621 = vcombine.high %v617, %v617
        %v622 = vlaneseq
        %v623 = vshrl.u32 %v622, 7
        %v624 = vsub.s32 0, %v623
        %v625 = vrot.slane %v596, %v624
        %v626 = vlaneseq
        %v627 = vshrl.u32 %v626, 7
        %v628 = vsub.s32 0, %v627
        %v629 = vrot.slane %v610, %v628
        %v630 = vlaneseq
        %v631 = vshrl.u32 %v630, 7
        %v632 = vsub.s32 0, %v631
        %v633 = vrot.slane %v618, %v632
        %v634 = vlaneseq
        %v635 = vshrl.u32 %v634, 7
        %v636 = vsub.s32 0, %v635
        %v637 = vrot.slane %v620, %v636
        %v638 = vlaneseq
        %v639 = vshrl.u32 %v638, 7
        %v640 = vsub.s32 0, %v639
        %v641 = vrot.slane %v603, %v640
        %v642 = vlaneseq
        %v643 = vshrl.u32 %v642, 7
        %v644 = vsub.s32 0, %v643
        %v645 = vrot.slane %v617, %v644
        %v646 = vlaneseq
        %v647 = vshrl.u32 %v646, 7
        %v648 = vsub.s32 0, %v647
        %v649 = vrot.slane %v619, %v648
        %v650 = vlaneseq
        %v651 = vshrl.u32 %v650, 7
        %v652 = vsub.s32 0, %v651
        %v653 = vrot.slane %v621, %v652
        %v662 = vmul.f32 %v625, %v563
        %v663 = vmul.f32 %v629, %v564
        %v664 = vmul.f32 %v633, %v565
        %v665 = vmul.f32 %v637, %v566
        %v666 = vmul.f32 %v641, %v567
        %v667 = vmul.f32 %v645, %v568
        %v668 = vmul.f32 %v649, %v569
        %v669 = vmul.f32 %v653, %v570
        %670 = vadd.xlane.f32.xlu0 %v662
        %v671 = vpop.xlane.xlu0 %670
        %672 = vadd.xlane.f32.xlu0 %v663
        %v673 = vpop.xlane.xlu0 %672
        %674 = vadd.xlane.f32.xlu0 %v664
        %v675 = vpop.xlane.xlu0 %674
        %676 = vadd.xlane.f32.xlu0 %v665
        %v677 = vpop.xlane.xlu0 %676
        %678 = vadd.xlane.f32.xlu0 %v666
        %v679 = vpop.xlane.xlu0 %678
        %680 = vadd.xlane.f32.xlu0 %v667
        %v681 = vpop.xlane.xlu0 %680
        %682 = vadd.xlane.f32.xlu0 %v668
        %v683 = vpop.xlane.xlu0 %682
        %684 = vadd.xlane.f32.xlu0 %v669
        %v685 = vpop.xlane.xlu0 %684
        %v694 = vlaneseq
        %v695 = vand.u32 %v694, 127
        %v696 = vlaneseq
        %v697 = vshrl.u32 %v696, 7
        %v698 = vsub.s32 %v695, %v697
        %v699 = vrot.slane %v671, %v698
        %v700 = vlaneseq
        %v701 = vshrl.u32 %v700, 7
        %v702 = vsub.s32 %v695, %v701
        %v703 = vrot.slane %v673, %v702
        %v704 = vlaneseq
        %v705 = vshrl.u32 %v704, 7
        %v706 = vsub.s32 %v695, %v705
        %v707 = vrot.slane %v675, %v706
        %v708 = vlaneseq
        %v709 = vshrl.u32 %v708, 7
        %v710 = vsub.s32 %v695, %v709
        %v711 = vrot.slane %v677, %v710
        %v712 = vlaneseq
        %v713 = vshrl.u32 %v712, 7
        %v714 = vsub.s32 %v695, %v713
        %v715 = vrot.slane %v679, %v714
        %v716 = vlaneseq
        %v717 = vshrl.u32 %v716, 7
        %v718 = vsub.s32 %v695, %v717
        %v719 = vrot.slane %v681, %v718
        %v720 = vlaneseq
        %v721 = vshrl.u32 %v720, 7
        %v722 = vsub.s32 %v695, %v721
        %v723 = vrot.slane %v683, %v722
        %v724 = vlaneseq
        %v725 = vshrl.u32 %v724, 7
        %v726 = vsub.s32 %v695, %v725
        %v727 = vrot.slane %v685, %v726
        %vm728 = vcmask 1041409
        %v729 = vsel %vm728, %v703, %v699
        %vm730 = vcmask 1042434
        %v731 = vsel %vm730, %v707, %v729
        %vm732 = vcmask 1043459
        %v733 = vsel %vm732, %v711, %v731
        %vm734 = vcmask 1044484
        %v735 = vsel %vm734, %v715, %v733
        %vm736 = vcmask 1045509
        %v737 = vsel %vm736, %v719, %v735
        %vm738 = vcmask 1046534
        %v739 = vsel %vm738, %v723, %v737
        %vm740 = vcmask 1047559
        %v741 = vsel %vm740, %v727, %v739
        %vm743 = vcmask 64512
        %v744 = vsel %vm743, %v741, -inf
        %745 = vmax.xlane.f32.xlu0 %v744
        %v746 = vpop.xlane.xlu0 %745
        %v748 = vlaneseq
        %v749 = vshrl.u32 %v748, 7
        %v750 = vsub.s32 0, %v749
        %v751 = vrot.slane %v746, %v750
        %v752 = vlaneseq
        %v753 = vshrl.u32 %v752, 7
        %v754 = vsub.s32 1, %v753
        %v755 = vrot.slane %v746, %v754
        %v756 = vlaneseq
        %v757 = vshrl.u32 %v756, 7
        %v758 = vsub.s32 2, %v757
        %v759 = vrot.slane %v746, %v758
        %v760 = vlaneseq
        %v761 = vshrl.u32 %v760, 7
        %v762 = vsub.s32 3, %v761
        %v763 = vrot.slane %v746, %v762
        %v764 = vlaneseq
        %v765 = vshrl.u32 %v764, 7
        %v766 = vsub.s32 4, %v765
        %v767 = vrot.slane %v746, %v766
        %v768 = vlaneseq
        %v769 = vshrl.u32 %v768, 7
        %v770 = vsub.s32 5, %v769
        %v771 = vrot.slane %v746, %v770
        %v772 = vlaneseq
        %v773 = vshrl.u32 %v772, 7
        %v774 = vsub.s32 6, %v773
        %v775 = vrot.slane %v746, %v774
        %v776 = vlaneseq
        %v777 = vshrl.u32 %v776, 7
        %v778 = vsub.s32 7, %v777
        %v779 = vrot.slane %v746, %v778
        %v788 = vsub.f32 %v671, %v751
        %v789 = vsub.f32 %v673, %v755
        %v790 = vsub.f32 %v675, %v759
        %v791 = vsub.f32 %v677, %v763
        %v792 = vsub.f32 %v679, %v767
        %v793 = vsub.f32 %v681, %v771
        %v794 = vsub.f32 %v683, %v775
        %v795 = vsub.f32 %v685, %v779
        %v796 = vmul.f32 %v788, 1.442695
        %v797 = vpow.pop %v796
        %v798 = vmul.f32 %v789, 1.442695
        %v799 = vpow.pop %v798
        %v800 = vmul.f32 %v790, 1.442695
        %v801 = vpow.pop %v800
        %v802 = vmul.f32 %v791, 1.442695
        %v803 = vpow.pop %v802
        %v804 = vmul.f32 %v792, 1.442695
        %v805 = vpow.pop %v804
        %v806 = vmul.f32 %v793, 1.442695
        %v807 = vpow.pop %v806
        %v808 = vmul.f32 %v794, 1.442695
        %v809 = vpow.pop %v808
        %v810 = vmul.f32 %v795, 1.442695
        %v811 = vpow.pop %v810
        %820 = vset.pattern.permute.xlu0 0
        %821 = vperm.xlu0 %820, %v797
        %v822 = vpop.permute.xlu0 %821
        %823 = vset.pattern.permute.xlu0 0
        %824 = vperm.xlu0 %823, %v799
        %v825 = vpop.permute.xlu0 %824
        %826 = vset.pattern.permute.xlu0 0
        %827 = vperm.xlu0 %826, %v801
        %v828 = vpop.permute.xlu0 %827
        %829 = vset.pattern.permute.xlu0 0
        %830 = vperm.xlu0 %829, %v803
        %v831 = vpop.permute.xlu0 %830
        %832 = vset.pattern.permute.xlu0 0
        %833 = vperm.xlu0 %832, %v805
        %v834 = vpop.permute.xlu0 %833
        %835 = vset.pattern.permute.xlu0 0
        %836 = vperm.xlu0 %835, %v807
        %v837 = vpop.permute.xlu0 %836
        %838 = vset.pattern.permute.xlu0 0
        %839 = vperm.xlu0 %838, %v809
        %v840 = vpop.permute.xlu0 %839
        %841 = vset.pattern.permute.xlu0 0
        %842 = vperm.xlu0 %841, %v811
        %v843 = vpop.permute.xlu0 %842
        %v844 = vlaneseq
        %v845 = vshrl.u32 %v844, 7
        %v846 = vsub.s32 %v695, %v845
        %v847 = vrot.slane %v822, %v846
        %v848 = vlaneseq
        %v849 = vshrl.u32 %v848, 7
        %v850 = vsub.s32 %v695, %v849
        %v851 = vrot.slane %v825, %v850
        %v852 = vlaneseq
        %v853 = vshrl.u32 %v852, 7
        %v854 = vsub.s32 %v695, %v853
        %v855 = vrot.slane %v828, %v854
        %v856 = vlaneseq
        %v857 = vshrl.u32 %v856, 7
        %v858 = vsub.s32 %v695, %v857
        %v859 = vrot.slane %v831, %v858
        %v860 = vlaneseq
        %v861 = vshrl.u32 %v860, 7
        %v862 = vsub.s32 %v695, %v861
        %v863 = vrot.slane %v834, %v862
        %v864 = vlaneseq
        %v865 = vshrl.u32 %v864, 7
        %v866 = vsub.s32 %v695, %v865
        %v867 = vrot.slane %v837, %v866
        %v868 = vlaneseq
        %v869 = vshrl.u32 %v868, 7
        %v870 = vsub.s32 %v695, %v869
        %v871 = vrot.slane %v840, %v870
        %v872 = vlaneseq
        %v873 = vshrl.u32 %v872, 7
        %v874 = vsub.s32 %v695, %v873
        %v875 = vrot.slane %v843, %v874
        %v876 = vsel %vm728, %v851, %v847
        %v877 = vsel %vm730, %v855, %v876
        %v878 = vsel %vm732, %v859, %v877
        %v879 = vsel %vm734, %v863, %v878
        %v880 = vsel %vm736, %v867, %v879
        %v881 = vsel %vm738, %v871, %v880
        %v882 = vsel %vm740, %v875, %v881
        %v884 = vsel %vm743, %v882, 0.0
        %885 = vadd.xlane.f32.xlu0 %v884
        %v886 = vpop.xlane.xlu0 %885
        %v887 = vrcp.pop %v886
        %v889 = vlaneseq
        %v890 = vshrl.u32 %v889, 7
        %v891 = vsub.s32 0, %v890
        %v892 = vrot.slane %v887, %v891
        %v893 = vlaneseq
        %v894 = vshrl.u32 %v893, 7
        %v895 = vsub.s32 1, %v894
        %v896 = vrot.slane %v887, %v895
        %v897 = vlaneseq
        %v898 = vshrl.u32 %v897, 7
        %v899 = vsub.s32 2, %v898
        %v900 = vrot.slane %v887, %v899
        %v901 = vlaneseq
        %v902 = vshrl.u32 %v901, 7
        %v903 = vsub.s32 3, %v902
        %v904 = vrot.slane %v887, %v903
        %v905 = vlaneseq
        %v906 = vshrl.u32 %v905, 7
        %v907 = vsub.s32 4, %v906
        %v908 = vrot.slane %v887, %v907
        %v909 = vlaneseq
        %v910 = vshrl.u32 %v909, 7
        %v911 = vsub.s32 5, %v910
        %v912 = vrot.slane %v887, %v911
        %v913 = vlaneseq
        %v914 = vshrl.u32 %v913, 7
        %v915 = vsub.s32 6, %v914
        %v916 = vrot.slane %v887, %v915
        %v917 = vlaneseq
        %v918 = vshrl.u32 %v917, 7
        %v919 = vsub.s32 7, %v918
        %v920 = vrot.slane %v887, %v919
        %v929 = vmul.f32 %v797, %v892
        %v930 = vmul.f32 %v799, %v896
        %v931 = vmul.f32 %v801, %v900
        %v932 = vmul.f32 %v803, %v904
        %v933 = vmul.f32 %v805, %v908
        %v934 = vmul.f32 %v807, %v912
        %v935 = vmul.f32 %v809, %v916
        %v936 = vmul.f32 %v811, %v920
        %v937 = vld [vmem:[%s4] sm:$0xff]
        %v938 = vld [vmem:[%s4 + $0x8] sm:$0xff]
        %v939 = vld [vmem:[%s4 + $0x10] sm:$0xff]
        %v940 = vld [vmem:[%s4 + $0x18] sm:$0xff]
        %v941 = vld [vmem:[%s4 + $0x20] sm:$0xff]
        %v942 = vld [vmem:[%s4 + $0x28] sm:$0xff]
        %v943 = vld [vmem:[%s4 + $0x30] sm:$0xff]
        %v944 = vld [vmem:[%s4 + $0x38] sm:$0xff]
        %v945 = vld [vmem:[%s4 + $0x40] sm:$0xff]
        %v946 = vld [vmem:[%s4 + $0x48] sm:$0xff]
        %v947 = vld [vmem:[%s4 + $0x50] sm:$0xff]
        %v948 = vld [vmem:[%s4 + $0x58] sm:$0xff]
        %v949 = vld [vmem:[%s4 + $0x60] sm:$0xff]
        %v950 = vld [vmem:[%s4 + $0x68] sm:$0xff]
        %v951 = vld [vmem:[%s4 + $0x70] sm:$0xff]
        %v952 = vld [vmem:[%s4 + $0x78] sm:$0xff]
        %953 = vmatprep.subr.mxu0 0.0
        %954 = vmatpush1.msra.mxu0 %v952
        %955 = vmatprep.subr.mxu0 0.0
        %956 = vmatpush1.msra.mxu0 %v951
        %957 = vmatprep.subr.mxu0 0.0
        %958 = vmatpush1.msra.mxu0 %v950
        %959 = vmatprep.subr.mxu0 0.0
        %960 = vmatpush1.msra.mxu0 %v949
        %961 = vmatprep.subr.mxu0 0.0
        %962 = vmatpush1.msra.mxu0 %v948
        %963 = vmatprep.subr.mxu0 0.0
        %964 = vmatpush1.msra.mxu0 %v947
        %965 = vmatprep.subr.mxu0 0.0
        %966 = vmatpush1.msra.mxu0 %v946
        %967 = vmatprep.subr.mxu0 0.0
        %968 = vmatpush1.msra.mxu0 %v945
        %969 = vmatprep.subr.mxu0 0.0
        %970 = vmatpush1.msra.mxu0 %v944
        %971 = vmatprep.subr.mxu0 0.0
        %972 = vmatpush1.msra.mxu0 %v943
        %973 = vmatprep.subr.mxu0 0.0
        %974 = vmatpush1.msra.mxu0 %v942
        %975 = vmatprep.subr.mxu0 0.0
        %976 = vmatpush1.msra.mxu0 %v941
        %977 = vmatprep.subr.mxu0 0.0
        %978 = vmatpush1.msra.mxu0 %v940
        %979 = vmatprep.subr.mxu0 0.0
        %980 = vmatpush1.msra.mxu0 %v939
        %981 = vmatprep.subr.mxu0 0.0
        %982 = vmatpush1.msra.mxu0 %v938
        %983 = vmatprep.subr.mxu0 0.0
        %984 = vmatpush1.msra.mxu0 %v937
        %985 = vmatprep.subr.mxu0 0.0
        %986 = vmatpush2.msra.mxu0 0.0
        %987 = vmatprep.subr.mxu0 0.0
        %988 = vmatpush2.msra.mxu0 0.0
        %989 = vmatprep.subr.mxu0 0.0
        %990 = vmatpush2.msra.mxu0 0.0
        %991 = vmatprep.subr.mxu0 0.0
        %992 = vmatpush2.msra.mxu0 0.0
        %993 = vmatprep.subr.mxu0 0.0
        %994 = vmatpush2.msra.mxu0 0.0
        %995 = vmatprep.subr.mxu0 0.0
        %996 = vmatpush2.msra.mxu0 0.0
        %997 = vmatprep.subr.mxu0 0.0
        %998 = vmatpush2.msra.mxu0 0.0
        %999 = vmatprep.subr.mxu0 0.0
        %1000 = vmatpush2.msra.mxu0 0.0
        %1001 = vmatprep.subr.mxu0 0.0
        %1002 = vmatpush2.msra.mxu0 0.0
        %1003 = vmatprep.subr.mxu0 0.0
        %1004 = vmatpush2.msra.mxu0 0.0
        %1005 = vmatprep.subr.mxu0 0.0
        %1006 = vmatpush2.msra.mxu0 0.0
        %1007 = vmatprep.subr.mxu0 0.0
        %1008 = vmatpush2.msra.mxu0 0.0
        %1009 = vmatprep.subr.mxu0 0.0
        %1010 = vmatpush2.msra.mxu0 0.0
        %1011 = vmatprep.subr.mxu0 0.0
        %1012 = vmatpush2.msra.mxu0 0.0
        %1013 = vmatprep.subr.mxu0 0.0
        %1014 = vmatpush2.msra.mxu0 0.0
        %1015 = vmatprep.subr.mxu0 0.0
        %1016 = vmatpush2.msra.mxu0 0.0
        %1017 = vmatprep.mubr.f32.mxu0 0.0
        %1018 = vmatmul.mubr.f32.gmra.mxu0 %v433
        %v1019 = vpop.f32.mrf.mxu0
        %v1020 = vadd.f32 0.0, %v1019
        %v1021 = vpop.f32.mrf.mxu0
        %1022 = vmatprep.mubr.f32.mxu0 0.0
        %1023 = vmatmul.mubr.f32.gmra.mxu0 %v434
        %v1024 = vpop.f32.mrf.mxu0
        %v1025 = vadd.f32 0.0, %v1024
        %v1026 = vpop.f32.mrf.mxu0
        %1027 = vmatprep.mubr.f32.mxu0 0.0
        %1028 = vmatmul.mubr.f32.gmra.mxu0 %v435
        %v1029 = vpop.f32.mrf.mxu0
        %v1030 = vadd.f32 0.0, %v1029
        %v1031 = vpop.f32.mrf.mxu0
        %1032 = vmatprep.mubr.f32.mxu0 0.0
        %1033 = vmatmul.mubr.f32.gmra.mxu0 %v436
        %v1034 = vpop.f32.mrf.mxu0
        %v1035 = vadd.f32 0.0, %v1034
        %v1036 = vpop.f32.mrf.mxu0
        %1037 = vmatprep.mubr.f32.mxu0 0.0
        %1038 = vmatmul.mubr.f32.gmra.mxu0 %v437
        %v1039 = vpop.f32.mrf.mxu0
        %v1040 = vadd.f32 0.0, %v1039
        %v1041 = vpop.f32.mrf.mxu0
        %1042 = vmatprep.mubr.f32.mxu0 0.0
        %1043 = vmatmul.mubr.f32.gmra.mxu0 %v438
        %v1044 = vpop.f32.mrf.mxu0
        %v1045 = vadd.f32 0.0, %v1044
        %v1046 = vpop.f32.mrf.mxu0
        %1047 = vmatprep.mubr.f32.mxu0 0.0
        %1048 = vmatmul.mubr.f32.gmra.mxu0 %v439
        %v1049 = vpop.f32.mrf.mxu0
        %v1050 = vadd.f32 0.0, %v1049
        %v1051 = vpop.f32.mrf.mxu0
        %1052 = vmatprep.mubr.f32.mxu0 0.0
        %1053 = vmatmul.mubr.f32.gmra.mxu0 %v440
        %v1054 = vpop.f32.mrf.mxu0
        %v1055 = vadd.f32 0.0, %v1054
        %v1056 = vpop.f32.mrf.mxu0
        %1057 = vdwg.mxu0
        %v1058 = vld [vmem:[#allocation10] sm:$0xff]
        %v1059 = vadd.f32 %v1020, %v1058
        %v1060 = vadd.f32 %v1025, %v1058
        %v1061 = vadd.f32 %v1030, %v1058
        %v1062 = vadd.f32 %v1035, %v1058
        %v1063 = vadd.f32 %v1040, %v1058
        %v1064 = vadd.f32 %v1045, %v1058
        %v1065 = vadd.f32 %v1050, %v1058
        %v1066 = vadd.f32 %v1055, %v1058
        %1068 = vset.pattern.permute.xlu0 0
        %1069 = vperm.xlu0 %1068, %v929
        %v1070 = vpop.permute.xlu0 %1069
        %1073 = vset.pattern.permute.xlu0 0
        %1074 = vperm.xlu0 %1073, %v930
        %v1075 = vpop.permute.xlu0 %1074
        %1078 = vset.pattern.permute.xlu0 0
        %1079 = vperm.xlu0 %1078, %v931
        %v1080 = vpop.permute.xlu0 %1079
        %1083 = vset.pattern.permute.xlu0 0
        %1084 = vperm.xlu0 %1083, %v932
        %v1085 = vpop.permute.xlu0 %1084
        %1088 = vset.pattern.permute.xlu0 0
        %1089 = vperm.xlu0 %1088, %v933
        %v1090 = vpop.permute.xlu0 %1089
        %1093 = vset.pattern.permute.xlu0 0
        %1094 = vperm.xlu0 %1093, %v934
        %v1095 = vpop.permute.xlu0 %1094
        %1098 = vset.pattern.permute.xlu0 0
        %1099 = vperm.xlu0 %1098, %v935
        %v1100 = vpop.permute.xlu0 %1099
        %1103 = vset.pattern.permute.xlu0 0
        %1104 = vperm.xlu0 %1103, %v936
        %v1105 = vpop.permute.xlu0 %1104
        %v1107 = vmul.f32 %v1070, %v1059
        %v1108 = vmul.f32 %v1075, %v1060
        %v1109 = vmul.f32 %v1080, %v1061
        %v1110 = vmul.f32 %v1085, %v1062
        %v1111 = vmul.f32 %v1090, %v1063
        %v1112 = vmul.f32 %v1095, %v1064
        %v1113 = vmul.f32 %v1100, %v1065
        %v1114 = vmul.f32 %v1105, %v1066
        %v1115 = vrot.slane %v1107, 4
        %v1116 = vadd.f32 %v1107, %v1115
        %v1117 = vrot.slane %v1116, 2
        %v1118 = vadd.f32 %v1116, %v1117
        %v1119 = vrot.slane %v1118, 1
        %v1120 = vadd.f32 %v1118, %v1119
        %v1121 = vrot.slane %v1108, 4
        %v1122 = vadd.f32 %v1108, %v1121
        %v1123 = vrot.slane %v1122, 2
        %v1124 = vadd.f32 %v1122, %v1123
        %v1125 = vrot.slane %v1124, 1
        %v1126 = vadd.f32 %v1124, %v1125
        %v1127 = vrot.slane %v1109, 4
        %v1128 = vadd.f32 %v1109, %v1127
        %v1129 = vrot.slane %v1128, 2
        %v1130 = vadd.f32 %v1128, %v1129
        %v1131 = vrot.slane %v1130, 1
        %v1132 = vadd.f32 %v1130, %v1131
        %v1133 = vrot.slane %v1110, 4
        %v1134 = vadd.f32 %v1110, %v1133
        %v1135 = vrot.slane %v1134, 2
        %v1136 = vadd.f32 %v1134, %v1135
        %v1137 = vrot.slane %v1136, 1
        %v1138 = vadd.f32 %v1136, %v1137
        %v1139 = vrot.slane %v1111, 4
        %v1140 = vadd.f32 %v1111, %v1139
        %v1141 = vrot.slane %v1140, 2
        %v1142 = vadd.f32 %v1140, %v1141
        %v1143 = vrot.slane %v1142, 1
        %v1144 = vadd.f32 %v1142, %v1143
        %v1145 = vrot.slane %v1112, 4
        %v1146 = vadd.f32 %v1112, %v1145
        %v1147 = vrot.slane %v1146, 2
        %v1148 = vadd.f32 %v1146, %v1147
        %v1149 = vrot.slane %v1148, 1
        %v1150 = vadd.f32 %v1148, %v1149
        %v1151 = vrot.slane %v1113, 4
        %v1152 = vadd.f32 %v1113, %v1151
        %v1153 = vrot.slane %v1152, 2
        %v1154 = vadd.f32 %v1152, %v1153
        %v1155 = vrot.slane %v1154, 1
        %v1156 = vadd.f32 %v1154, %v1155
        %v1157 = vrot.slane %v1114, 4
        %v1158 = vadd.f32 %v1114, %v1157
        %v1159 = vrot.slane %v1158, 2
        %v1160 = vadd.f32 %v1158, %v1159
        %v1161 = vrot.slane %v1160, 1
        %v1162 = vadd.f32 %v1160, %v1161
        %v1171 = vsel %vm728, %v1126, %v1120
        %v1172 = vsel %vm730, %v1132, %v1171
        %v1173 = vsel %vm732, %v1138, %v1172
        %v1174 = vsel %vm734, %v1144, %v1173
        %v1175 = vsel %vm736, %v1150, %v1174
        %v1176 = vsel %vm738, %v1156, %v1175
        %v1177 = vsel %vm740, %v1162, %v1176
        %1179 = vst [vmem:[%s423] sm:$0xff] %v1177
        %v1180 = vld [vmem:[%s357] sm:$0xff]
        %v1182 = vcombine.high %v1180, %v1180
        %v1184 = vunpack.c.l.s4 1966171168
        %v1185 = vunpack.c.0.s8 %v1184
        %v1186 = vlaneseq
        %v1187 = vshrl.u32 %v1186, 7
        %v1188 = vsub.s32 %v1185, %v1187
        %v1189 = vrot.slane %v1180, %v1188
        %v1191 = vunpack.c.l.s4 1966171168
        %v1192 = vunpack.c.0.s8 %v1191
        %v1193 = vlaneseq
        %v1194 = vshrl.u32 %v1193, 7
        %v1195 = vsub.s32 %v1192, %v1194
        %v1196 = vrot.slane %v1182, %v1195
        %v1197 = vcombine.high %v1189, %v1189
        %v1198 = vcombine.high %v1196, %v1196
        %v1200 = vunpack.c.l.s4 1966171168
        %v1201 = vunpack.c.0.s8 %v1200
        %v1202 = vlaneseq
        %v1203 = vshrl.u32 %v1202, 7
        %v1204 = vsub.s32 %v1201, %v1203
        %v1205 = vrot.slane %v1189, %v1204
        %v1207 = vunpack.c.l.s4 1966171168
        %v1208 = vunpack.c.0.s8 %v1207
        %v1209 = vlaneseq
        %v1210 = vshrl.u32 %v1209, 7
        %v1211 = vsub.s32 %v1208, %v1210
        %v1212 = vrot.slane %v1196, %v1211
        %v1214 = vunpack.c.l.s4 1966171168
        %v1215 = vunpack.c.0.s8 %v1214
        %v1216 = vlaneseq
        %v1217 = vshrl.u32 %v1216, 7
        %v1218 = vsub.s32 %v1215, %v1217
        %v1219 = vrot.slane %v1197, %v1218
        %v1221 = vunpack.c.l.s4 1966171168
        %v1222 = vunpack.c.0.s8 %v1221
        %v1223 = vlaneseq
        %v1224 = vshrl.u32 %v1223, 7
        %v1225 = vsub.s32 %v1222, %v1224
        %v1226 = vrot.slane %v1198, %v1225
        %v1227 = vcombine.high %v1205, %v1205
        %v1228 = vcombine.high %v1212, %v1212
        %v1229 = vcombine.high %v1219, %v1219
        %v1230 = vcombine.high %v1226, %v1226
        %v1247 = vrot.slane %v433, 7
        %v1248 = vrot.slane %v434, 7
        %v1249 = vrot.slane %v435, 7
        %v1250 = vrot.slane %v436, 7
        %v1251 = vrot.slane %v437, 7
        %v1252 = vrot.slane %v438, 7
        %v1253 = vrot.slane %v439, 7
        %v1254 = vrot.slane %v440, 7
        %vm1263 = vcmask 1040384
        %v1264 = vsel %vm1263, %v1205, %v1247
        %v1265 = vsel %vm1263, %v1219, %v1248
        %v1266 = vsel %vm1263, %v1227, %v1249
        %v1267 = vsel %vm1263, %v1229, %v1250
        %v1268 = vsel %vm1263, %v1212, %v1251
        %v1269 = vsel %vm1263, %v1226, %v1252
        %v1270 = vsel %vm1263, %v1228, %v1253
        %v1271 = vsel %vm1263, %v1230, %v1254
        %1272 = vst [vmem:[%s430] sm:$0xff] %v1264
        %1273 = vst [vmem:[%s430 + $0x8] sm:$0xff] %v1265
        %1274 = vst [vmem:[%s430 + $0x10] sm:$0xff] %v1266
        %1275 = vst [vmem:[%s430 + $0x18] sm:$0xff] %v1267
        %1276 = vst [vmem:[%s430 + $0x20] sm:$0xff] %v1268
        %1277 = vst [vmem:[%s430 + $0x28] sm:$0xff] %v1269
        %1278 = vst [vmem:[%s430 + $0x30] sm:$0xff] %v1270
        %1279 = vst [vmem:[%s430 + $0x38] sm:$0xff] %v1271
        %s1280 = sand.u32 %s203, 1
        %s1281 = scalar_lea.sflag [#allocation4], %s1280
        %s1282 = sand.u32 %s203, 1
        %s1283 = smul.addr %s1282, 8
        %s1284 = scalar_lea.vmem [#allocation11], %s1283
        %s1285 = sand.u32 %s229, 1
        %s1286 = scalar_lea.sflag [#allocation13], %s1285
        %s1287 = sand.u32 %s229, 1
        %s1288 = smul.addr %s1287, 64
        %s1289 = scalar_lea.vmem [#allocation12], %s1288
        // Predicated region
        $region69: #{tpu_custom_call.1} parent=47 // pred_check
          %p1290 = pneg %p213
        $region70: #{tpu_custom_call.1} parent=47 // pred_check_branch
          %1292 = sbr.rel (%p1290) target = $region72
        $region71: #{tpu_custom_call.1} parent=47 // pred_region
          %s1294 = ssub.s32 128, 128
          %1295 = vsyncadd %s1281, %s1294
          %s1296 = smul.addr %s33, 128
          %s1297 = scalar_lea.hbm %s7, %s1296
          %s1299 = sshll.u32 %s1284, 4
          %s1300 = int_to_ptr.vmem [resolvable:$true] %s1299
          %1302 = dma.vmem_to_hbm [thread:$0]  %s1300, 128, %s1297, %s1281
        $region72: #{tpu_custom_call.1} parent=47 // pred_fallthru
          _
        // Predicated region
        $region73: #{tpu_custom_call.1} parent=47 // pred_check
          %p1303 = pneg %p239
        $region74: #{tpu_custom_call.1} parent=47 // pred_check_branch
          %1305 = sbr.rel (%p1303) target = $region76
        $region75: #{tpu_custom_call.1} parent=47 // pred_region
          %s1306 = smul.u32 8, %s33
          %s1308 = ssub.s32 1024, 1024
          %1309 = vsyncadd %s1286, %s1308
          %s1310 = smul.addr %s1306, 128
          %s1311 = scalar_lea.hbm %s8, %s1310
          %s1312 = sshll.u32 %s1289, 4
          %s1313 = int_to_ptr.vmem [resolvable:$true] %s1312
          %1318 = dma.vmem_to_hbm [thread:$0]  %s1313, 1024, %s1311, %s1286, 128, 128, 8
        $region76: #{tpu_custom_call.1} parent=47 // pred_fallthru
          _
      $region48: #{tpu_custom_call.1} parent=5 // pred_fallthru
        _
      %p1319 = scmp.le.s32.totalorder 2, %s28
      // Predicated region
      $region77: #{tpu_custom_call.1} parent=5 // pred_check
        %p1320 = pneg %p1319
      $region78: #{tpu_custom_call.1} parent=5 // pred_check_branch
        %1322 = sbr.rel (%p1320) target = $region80
      $region79: #{tpu_custom_call.1} parent=5 // pred_region
        %s1323 = ssub.s32 %s28, 2
        // Predicated region
        $region81: #{tpu_custom_call.1} parent=79 // pred_check
          %p1324 = pneg %p219
        $region82: #{tpu_custom_call.1} parent=79 // pred_check_branch
          %1326 = sbr.rel (%p1324) target = $region84
        $region83: #{tpu_custom_call.1} parent=79 // pred_region
          %s1327 = sand.u32 %s204, 1
          %s1328 = scalar_lea.sflag [#allocation4], %s1327
          %s1329 = sand.u32 %s204, 1
          %s1330 = smul.addr %s1329, 8
          %s1331 = scalar_lea.vmem [#allocation11], %s1330
          %1332 = dma.done %s1328, 128
        $region84: #{tpu_custom_call.1} parent=79 // pred_fallthru
          _
        // Predicated region
        $region85: #{tpu_custom_call.1} parent=79 // pred_check
          %p1333 = pneg %p245
        $region86: #{tpu_custom_call.1} parent=79 // pred_check_branch
          %1335 = sbr.rel (%p1333) target = $region88
        $region87: #{tpu_custom_call.1} parent=79 // pred_region
          %s1336 = sand.u32 %s230, 1
          %s1337 = scalar_lea.sflag [#allocation13], %s1336
          %s1338 = sand.u32 %s230, 1
          %s1339 = smul.addr %s1338, 64
          %s1340 = scalar_lea.vmem [#allocation12], %s1339
          %1341 = dma.done %s1337, 1024
        $region88: #{tpu_custom_call.1} parent=79 // pred_fallthru
          _
      $region80: #{tpu_custom_call.1} parent=5 // pred_fallthru
        _
    $region6: #{tpu_custom_call.1} parent=1 // loop_footer
      %s32 = sadd.s32 1, %s28
    $region7: #{tpu_custom_call.1} parent=1 // loop_footer_branch
      %27 = sbr.rel target = $region3
    $region8: #{tpu_custom_call.1} parent=1 // loop_exit
      _
    %1342 = vsyncpa [#allocation3], 1
    %s1343 = scalar_lea.sflag [#allocation3], 1
    %1344 = vsyncpa %s1343, 1
    %1345 = vsyncpa [#allocation6], 1
    %s1346 = scalar_lea.sflag [#allocation6], 1
    %1347 = vsyncpa %s1346, 1
    %1348 = vsyncpa [#allocation9], 1
    %1349 = vsyncpa [#allocation4], 1
    %s1350 = scalar_lea.sflag [#allocation4], 1
    %1351 = vsyncpa %s1350, 1
    %1352 = vsyncpa [#allocation13], 1
    %s1353 = scalar_lea.sflag [#allocation13], 1
    %1354 = vsyncpa %s1353, 1

</llo_original>
